<compile_context>
chip_gen: v5e
topology: v5e:2x2
jax: 0.10.0
libtpu: 0.0.40
codegen_flags: <defaults>
</compile_context>

<pallas_src>
import jax
import jax.numpy as jnp
from jax import lax
from jax.experimental import pallas as pl
from jax.experimental.pallas import tpu as pltpu


def lstm_kernel(xp_ref, h0_ref, c0_ref, whh_ref, out_ref, cn_ref):
    """Single invocation: full time loop unrolled in-kernel.

    xp_ref : (B, T, 4H)  precomputed x @ W_ih^T + (b_ih + b_hh), batch_first
    h0_ref : (B, H)
    c0_ref : (B, H)
    whh_ref: (H, 4H)     W_hh^T
    out_ref: (B, T, H)   all hidden states (batch_first)
    cn_ref : (B, H)      final cell state
    """
    B, T, G = xp_ref.shape
    H = h0_ref.shape[-1]

    whh = whh_ref[...]          # (H, 4H), loaded once, lives in vregs/VMEM
    xp = xp_ref[...]            # (B, T, 4H), tiny at these shapes
    h = h0_ref[...]             # (B, H)
    c = c0_ref[...]             # (B, H)

    # T is static -> Python loop == full unroll; h/c are carried SSA values
    # (no scratch refs needed since there is a single grid step).
    for t in range(T):
        # One MXU push per step on the serial path; input projection hoisted.
        z = xp[:, t, :] + jnp.dot(h, whh, preferred_element_type=jnp.float32)

        i_g = jax.nn.sigmoid(z[:, 0 * H:1 * H])
        f_g = jax.nn.sigmoid(z[:, 1 * H:2 * H])
        g_g = jnp.tanh(z[:, 2 * H:3 * H])
        o_g = jax.nn.sigmoid(z[:, 3 * H:4 * H])

        c = f_g * c + i_g * g_g
        h = o_g * jnp.tanh(c)

        out_ref[:, t, :] = h.astype(out_ref.dtype)

    cn_ref[...] = c.astype(cn_ref.dtype)


@jax.jit
def lstm_forward(state, h0, c0, w_ih, w_hh, b_ih, b_hh):
    """state: (B, T, D) batch_first. h0/c0: (1, B, H). Weights in PyTorch layout:
    w_ih (4H, D), w_hh (4H, H), b_ih/b_hh (4H,). Returns (outputs, (hn, cn))."""
    B, T, D = state.shape
    H = h0.shape[-1]
    G = 4 * H

    wih_t = jnp.transpose(w_ih).astype(jnp.float32)              # (D, 4H)
    whh_t = jnp.transpose(w_hh).astype(jnp.float32)              # (H, 4H)
    bias = (b_ih + b_hh).astype(jnp.float32)                     # (4H,)

    # Hoisted input projection: one big (B*T, D) x (D, 4H) matmul in XLA,
    # batch_first result so no transposes anywhere.
    xp = jnp.einsum('btd,dg->btg', state.astype(jnp.float32), wih_t,
                    precision=lax.Precision.HIGHEST) + bias       # (B, T, 4H)

    outputs, cn = pl.pallas_call(
        lstm_kernel,
        out_shape=(
            jax.ShapeDtypeStruct((B, T, H), jnp.float32),        # all hidden states
            jax.ShapeDtypeStruct((B, H), jnp.float32),           # c_n
        ),
        grid=(1,),
        in_specs=[
            pl.BlockSpec((B, T, G), lambda i: (0, 0, 0)),        # x projection
            pl.BlockSpec((B, H), lambda i: (0, 0)),              # h0
            pl.BlockSpec((B, H), lambda i: (0, 0)),              # c0
            pl.BlockSpec((H, G), lambda i: (0, 0)),              # W_hh^T
        ],
        out_specs=(
            pl.BlockSpec((B, T, H), lambda i: (0, 0, 0)),
            pl.BlockSpec((B, H), lambda i: (0, 0)),
        ),
        compiler_params=pltpu.CompilerParams(
            dimension_semantics=("arbitrary",),                  # single serial step
        ),
    )(xp, h0[0].astype(jnp.float32), c0[0].astype(jnp.float32), whh_t)

    hn = outputs[:, -1, :]                                       # h_n == last output
    return outputs, (hn[None], cn[None])                         # hn/cn: (1, B, H)


def lstm_reference(state, h0, c0, w_ih, w_hh, b_ih, b_hh):
    """Pure-JAX reference replicating PyTorch nn.LSTM semantics (gate order i,f,g,o)."""
    H = h0.shape[-1]
    wih_t = jnp.transpose(w_ih)
    whh_t = jnp.transpose(w_hh)
    bias = b_ih + b_hh

    def step(carry, x_t):
        h, c = carry
        z = (jnp.dot(x_t, wih_t, precision=lax.Precision.HIGHEST)
             + jnp.dot(h, whh_t, precision=lax.Precision.HIGHEST) + bias)
        i = jax.nn.sigmoid(z[:, 0 * H:1 * H])
        f = jax.nn.sigmoid(z[:, 1 * H:2 * H])
        g = jnp.tanh(z[:, 2 * H:3 * H])
        o = jax.nn.sigmoid(z[:, 3 * H:4 * H])
        c_new = f * c + i * g
        h_new = o * jnp.tanh(c_new)
        return (h_new, c_new), h_new

    x_tm = jnp.transpose(state, (1, 0, 2))
    (hn, cn), outs_tm = lax.scan(step, (h0[0], c0[0]), x_tm)
    return jnp.transpose(outs_tm, (1, 0, 2)), (hn[None], cn[None])


if __name__ == "__main__":
    # Small shapes consistent with the module's forward:
    #   state: (batch=2, seq=8, input_size=4), hidden_state: ((1, 2, 32), (1, 2, 32))
    B, T, D, H = 2, 8, 4, 32

    key = jax.random.PRNGKey(0)
    ks = jax.random.split(key, 7)
    k_scale = 1.0 / jnp.sqrt(jnp.float32(H))   # PyTorch-style uniform(-1/sqrt(H), 1/sqrt(H))

    state = jax.random.normal(ks[0], (B, T, D), dtype=jnp.float32)
    h0 = jax.random.normal(ks[1], (1, B, H), dtype=jnp.float32)
    c0 = jax.random.normal(ks[2], (1, B, H), dtype=jnp.float32)
    w_ih = jax.random.uniform(ks[3], (4 * H, D), minval=-k_scale, maxval=k_scale)
    w_hh = jax.random.uniform(ks[4], (4 * H, H), minval=-k_scale, maxval=k_scale)
    b_ih = jax.random.uniform(ks[5], (4 * H,), minval=-k_scale, maxval=k_scale)
    b_hh = jax.random.uniform(ks[6], (4 * H,), minval=-k_scale, maxval=k_scale)

    outputs, (hn, cn) = lstm_forward(state, h0, c0, w_ih, w_hh, b_ih, b_hh)
    jax.block_until_ready((outputs, hn, cn))

    # Correctness check against a pure-JAX reference.
    ref_out, (ref_hn, ref_cn) = lstm_reference(state, h0, c0, w_ih, w_hh, b_ih, b_hh)
    assert outputs.shape == (B, T, H) and hn.shape == (1, B, H) and cn.shape == (1, B, H)
    assert jnp.allclose(outputs, ref_out, atol=1e-4, rtol=1e-4)
    assert jnp.allclose(hn, ref_hn, atol=1e-4, rtol=1e-4)
    assert jnp.allclose(cn, ref_cn, atol=1e-4, rtol=1e-4)

    print("KERNEL_OK")
</pallas_src>

<mosaic_0001>
module attributes {stable_mosaic.version = 11 : i64} {
  func.func @lstm_kernel(%arg0: i32, %arg1: memref<2x8x128xf32, #tpu.memory_space<vmem>>, %arg2: memref<2x32xf32, #tpu.memory_space<vmem>>, %arg3: memref<2x32xf32, #tpu.memory_space<vmem>>, %arg4: memref<32x128xf32, #tpu.memory_space<vmem>>, %arg5: memref<2x8x32xf32, #tpu.memory_space<vmem>>, %arg6: memref<2x32xf32, #tpu.memory_space<vmem>>) attributes {dimension_semantics = [#tpu.dimension_semantics<arbitrary>], iteration_bounds = array<i64: 1>, scalar_prefetch = 0 : i64, scratch_operands = 0 : i64, tpu.core_type = #tpu.core_type<tc>, window_params = [{pipeline_mode = #tpu.pipeline_mode<synchronous>, transform_indices = @transform_0, window_bounds = array<i64: 2, 8, 128>}, {pipeline_mode = #tpu.pipeline_mode<synchronous>, transform_indices = @transform_1, window_bounds = array<i64: 2, 32>}, {pipeline_mode = #tpu.pipeline_mode<synchronous>, transform_indices = @transform_2, window_bounds = array<i64: 2, 32>}, {pipeline_mode = #tpu.pipeline_mode<synchronous>, transform_indices = @transform_3, window_bounds = array<i64: 32, 128>}, {pipeline_mode = #tpu.pipeline_mode<synchronous>, transform_indices = @transform_4, window_bounds = array<i64: 2, 8, 32>}, {pipeline_mode = #tpu.pipeline_mode<synchronous>, transform_indices = @transform_5, window_bounds = array<i64: 2, 32>}]} {
    %c0 = arith.constant 0 : index
    %c0_0 = arith.constant 0 : index
    %0 = vector.load %arg4[%c0, %c0_0] : memref<32x128xf32, #tpu.memory_space<vmem>>, vector<32x128xf32>
    %c0_1 = arith.constant 0 : index
    %c0_2 = arith.constant 0 : index
    %c0_3 = arith.constant 0 : index
    %1 = vector.load %arg1[%c0_1, %c0_2, %c0_3] : memref<2x8x128xf32, #tpu.memory_space<vmem>>, vector<2x8x128xf32>
    %c0_4 = arith.constant 0 : index
    %c0_5 = arith.constant 0 : index
    %2 = vector.load %arg2[%c0_4, %c0_5] : memref<2x32xf32, #tpu.memory_space<vmem>>, vector<2x32xf32>
    %c0_6 = arith.constant 0 : index
    %c0_7 = arith.constant 0 : index
    %3 = vector.load %arg3[%c0_6, %c0_7] : memref<2x32xf32, #tpu.memory_space<vmem>>, vector<2x32xf32>
    %4 = vector.extract_strided_slice %1 {offsets = [0, 0, 0], sizes = [2, 1, 128], strides = [1, 1, 1]} : vector<2x8x128xf32> to vector<2x1x128xf32>
    %5 = vector.shape_cast %4 : vector<2x1x128xf32> to vector<2x128xf32>
    %cst = arith.constant dense<0.000000e+00> : vector<2x128xf32>
    %6 = tpu.matmul %2, %0, %cst {dimension_numbers = #tpu.dot_dimension_numbers<[1], [0], [0], [1], [0, 0, 1, 1], [], []>} : vector<2x32xf32>, vector<32x128xf32>, vector<2x128xf32> -> vector<2x128xf32>
    %7 = arith.addf %5, %6 : vector<2x128xf32>
    %8 = vector.extract_strided_slice %7 {offsets = [0, 0], sizes = [2, 32], strides = [1, 1]} : vector<2x128xf32> to vector<2x32xf32>
    %9 = arith.negf %8 : vector<2x32xf32>
    %10 = math.exp %9 : vector<2x32xf32>
    %cst_8 = arith.constant 1.000000e+00 : f32
    %11 = vector.broadcast %cst_8 : f32 to vector<2x32xf32>
    %12 = arith.addf %11, %10 : vector<2x32xf32>
    %13 = arith.divf %11, %12 : vector<2x32xf32>
    %14 = vector.extract_strided_slice %7 {offsets = [0, 32], sizes = [2, 32], strides = [1, 1]} : vector<2x128xf32> to vector<2x32xf32>
    %15 = arith.negf %14 : vector<2x32xf32>
    %16 = math.exp %15 : vector<2x32xf32>
    %cst_9 = arith.constant 1.000000e+00 : f32
    %17 = vector.broadcast %cst_9 : f32 to vector<2x32xf32>
    %18 = arith.addf %17, %16 : vector<2x32xf32>
    %19 = arith.divf %17, %18 : vector<2x32xf32>
    %20 = vector.extract_strided_slice %7 {offsets = [0, 64], sizes = [2, 32], strides = [1, 1]} : vector<2x128xf32> to vector<2x32xf32>
    %21 = math.tanh %20 : vector<2x32xf32>
    %22 = vector.extract_strided_slice %7 {offsets = [0, 96], sizes = [2, 32], strides = [1, 1]} : vector<2x128xf32> to vector<2x32xf32>
    %23 = arith.negf %22 : vector<2x32xf32>
    %24 = math.exp %23 : vector<2x32xf32>
    %cst_10 = arith.constant 1.000000e+00 : f32
    %25 = vector.broadcast %cst_10 : f32 to vector<2x32xf32>
    %26 = arith.addf %25, %24 : vector<2x32xf32>
    %27 = arith.divf %25, %26 : vector<2x32xf32>
    %28 = arith.mulf %19, %3 : vector<2x32xf32>
    %29 = arith.mulf %13, %21 : vector<2x32xf32>
    %30 = arith.addf %28, %29 : vector<2x32xf32>
    %31 = math.tanh %30 : vector<2x32xf32>
    %32 = arith.mulf %27, %31 : vector<2x32xf32>
    %c0_11 = arith.constant 0 : index
    %c0_12 = arith.constant 0 : index
    %c0_13 = arith.constant 0 : index
    %33 = vector.load %arg5[%c0_11, %c0_12, %c0_13] : memref<2x8x32xf32, #tpu.memory_space<vmem>>, vector<2x1x32xf32>
    %34 = vector.shape_cast %33 : vector<2x1x32xf32> to vector<2x32xf32>
    %35 = vector.shape_cast %32 : vector<2x32xf32> to vector<2x1x32xf32>
    tpu.vector_store %arg5[%c0_11, %c0_12, %c0_13], %35 {strides = array<i32>} : memref<2x8x32xf32, #tpu.memory_space<vmem>>, vector<2x1x32xf32>,
    %36 = vector.extract_strided_slice %1 {offsets = [0, 1, 0], sizes = [2, 1, 128], strides = [1, 1, 1]} : vector<2x8x128xf32> to vector<2x1x128xf32>
    %37 = vector.shape_cast %36 : vector<2x1x128xf32> to vector<2x128xf32>
    %cst_14 = arith.constant dense<0.000000e+00> : vector<2x128xf32>
    %38 = tpu.matmul %32, %0, %cst_14 {dimension_numbers = #tpu.dot_dimension_numbers<[1], [0], [0], [1], [0, 0, 1, 1], [], []>} : vector<2x32xf32>, vector<32x128xf32>, vector<2x128xf32> -> vector<2x128xf32>
    %39 = arith.addf %37, %38 : vector<2x128xf32>
    %40 = vector.extract_strided_slice %39 {offsets = [0, 0], sizes = [2, 32], strides = [1, 1]} : vector<2x128xf32> to vector<2x32xf32>
    %41 = arith.negf %40 : vector<2x32xf32>
    %42 = math.exp %41 : vector<2x32xf32>
    %cst_15 = arith.constant 1.000000e+00 : f32
    %43 = vector.broadcast %cst_15 : f32 to vector<2x32xf32>
    %44 = arith.addf %43, %42 : vector<2x32xf32>
    %45 = arith.divf %43, %44 : vector<2x32xf32>
    %46 = vector.extract_strided_slice %39 {offsets = [0, 32], sizes = [2, 32], strides = [1, 1]} : vector<2x128xf32> to vector<2x32xf32>
    %47 = arith.negf %46 : vector<2x32xf32>
    %48 = math.exp %47 : vector<2x32xf32>
    %cst_16 = arith.constant 1.000000e+00 : f32
    %49 = vector.broadcast %cst_16 : f32 to vector<2x32xf32>
    %50 = arith.addf %49, %48 : vector<2x32xf32>
    %51 = arith.divf %49, %50 : vector<2x32xf32>
    %52 = vector.extract_strided_slice %39 {offsets = [0, 64], sizes = [2, 32], strides = [1, 1]} : vector<2x128xf32> to vector<2x32xf32>
    %53 = math.tanh %52 : vector<2x32xf32>
    %54 = vector.extract_strided_slice %39 {offsets = [0, 96], sizes = [2, 32], strides = [1, 1]} : vector<2x128xf32> to vector<2x32xf32>
    %55 = arith.negf %54 : vector<2x32xf32>
    %56 = math.exp %55 : vector<2x32xf32>
    %cst_17 = arith.constant 1.000000e+00 : f32
    %57 = vector.broadcast %cst_17 : f32 to vector<2x32xf32>
    %58 = arith.addf %57, %56 : vector<2x32xf32>
    %59 = arith.divf %57, %58 : vector<2x32xf32>
    %60 = arith.mulf %51, %30 : vector<2x32xf32>
    %61 = arith.mulf %45, %53 : vector<2x32xf32>
    %62 = arith.addf %60, %61 : vector<2x32xf32>
    %63 = math.tanh %62 : vector<2x32xf32>
    %64 = arith.mulf %59, %63 : vector<2x32xf32>
    %c0_18 = arith.constant 0 : index
    %c1 = arith.constant 1 : index
    %c0_19 = arith.constant 0 : index
    %65 = vector.load %arg5[%c0_18, %c1, %c0_19] : memref<2x8x32xf32, #tpu.memory_space<vmem>>, vector<2x1x32xf32>
    %66 = vector.shape_cast %65 : vector<2x1x32xf32> to vector<2x32xf32>
    %67 = vector.shape_cast %64 : vector<2x32xf32> to vector<2x1x32xf32>
    tpu.vector_store %arg5[%c0_18, %c1, %c0_19], %67 {strides = array<i32>} : memref<2x8x32xf32, #tpu.memory_space<vmem>>, vector<2x1x32xf32>,
    %68 = vector.extract_strided_slice %1 {offsets = [0, 2, 0], sizes = [2, 1, 128], strides = [1, 1, 1]} : vector<2x8x128xf32> to vector<2x1x128xf32>
    %69 = vector.shape_cast %68 : vector<2x1x128xf32> to vector<2x128xf32>
    %cst_20 = arith.constant dense<0.000000e+00> : vector<2x128xf32>
    %70 = tpu.matmul %64, %0, %cst_20 {dimension_numbers = #tpu.dot_dimension_numbers<[1], [0], [0], [1], [0, 0, 1, 1], [], []>} : vector<2x32xf32>, vector<32x128xf32>, vector<2x128xf32> -> vector<2x128xf32>
    %71 = arith.addf %69, %70 : vector<2x128xf32>
    %72 = vector.extract_strided_slice %71 {offsets = [0, 0], sizes = [2, 32], strides = [1, 1]} : vector<2x128xf32> to vector<2x32xf32>
    %73 = arith.negf %72 : vector<2x32xf32>
    %74 = math.exp %73 : vector<2x32xf32>
    %cst_21 = arith.constant 1.000000e+00 : f32
    %75 = vector.broadcast %cst_21 : f32 to vector<2x32xf32>
    %76 = arith.addf %75, %74 : vector<2x32xf32>
    %77 = arith.divf %75, %76 : vector<2x32xf32>
    %78 = vector.extract_strided_slice %71 {offsets = [0, 32], sizes = [2, 32], strides = [1, 1]} : vector<2x128xf32> to vector<2x32xf32>
    %79 = arith.negf %78 : vector<2x32xf32>
    %80 = math.exp %79 : vector<2x32xf32>
    %cst_22 = arith.constant 1.000000e+00 : f32
    %81 = vector.broadcast %cst_22 : f32 to vector<2x32xf32>
    %82 = arith.addf %81, %80 : vector<2x32xf32>
    %83 = arith.divf %81, %82 : vector<2x32xf32>
    %84 = vector.extract_strided_slice %71 {offsets = [0, 64], sizes = [2, 32], strides = [1, 1]} : vector<2x128xf32> to vector<2x32xf32>
    %85 = math.tanh %84 : vector<2x32xf32>
    %86 = vector.extract_strided_slice %71 {offsets = [0, 96], sizes = [2, 32], strides = [1, 1]} : vector<2x128xf32> to vector<2x32xf32>
    %87 = arith.negf %86 : vector<2x32xf32>
    %88 = math.exp %87 : vector<2x32xf32>
    %cst_23 = arith.constant 1.000000e+00 : f32
    %89 = vector.broadcast %cst_23 : f32 to vector<2x32xf32>
    %90 = arith.addf %89, %88 : vector<2x32xf32>
    %91 = arith.divf %89, %90 : vector<2x32xf32>
    %92 = arith.mulf %83, %62 : vector<2x32xf32>
    %93 = arith.mulf %77, %85 : vector<2x32xf32>
    %94 = arith.addf %92, %93 : vector<2x32xf32>
    %95 = math.tanh %94 : vector<2x32xf32>
    %96 = arith.mulf %91, %95 : vector<2x32xf32>
    %c0_24 = arith.constant 0 : index
    %c2 = arith.constant 2 : index
    %c0_25 = arith.constant 0 : index
    %97 = vector.load %arg5[%c0_24, %c2, %c0_25] : memref<2x8x32xf32, #tpu.memory_space<vmem>>, vector<2x1x32xf32>
    %98 = vector.shape_cast %97 : vector<2x1x32xf32> to vector<2x32xf32>
    %99 = vector.shape_cast %96 : vector<2x32xf32> to vector<2x1x32xf32>
    tpu.vector_store %arg5[%c0_24, %c2, %c0_25], %99 {strides = array<i32>} : memref<2x8x32xf32, #tpu.memory_space<vmem>>, vector<2x1x32xf32>,
    %100 = vector.extract_strided_slice %1 {offsets = [0, 3, 0], sizes = [2, 1, 128], strides = [1, 1, 1]} : vector<2x8x128xf32> to vector<2x1x128xf32>
    %101 = vector.shape_cast %100 : vector<2x1x128xf32> to vector<2x128xf32>
    %cst_26 = arith.constant dense<0.000000e+00> : vector<2x128xf32>
    %102 = tpu.matmul %96, %0, %cst_26 {dimension_numbers = #tpu.dot_dimension_numbers<[1], [0], [0], [1], [0, 0, 1, 1], [], []>} : vector<2x32xf32>, vector<32x128xf32>, vector<2x128xf32> -> vector<2x128xf32>
    %103 = arith.addf %101, %102 : vector<2x128xf32>
    %104 = vector.extract_strided_slice %103 {offsets = [0, 0], sizes = [2, 32], strides = [1, 1]} : vector<2x128xf32> to vector<2x32xf32>
    %105 = arith.negf %104 : vector<2x32xf32>
    %106 = math.exp %105 : vector<2x32xf32>
    %cst_27 = arith.constant 1.000000e+00 : f32
    %107 = vector.broadcast %cst_27 : f32 to vector<2x32xf32>
    %108 = arith.addf %107, %106 : vector<2x32xf32>
    %109 = arith.divf %107, %108 : vector<2x32xf32>
    %110 = vector.extract_strided_slice %103 {offsets = [0, 32], sizes = [2, 32], strides = [1, 1]} : vector<2x128xf32> to vector<2x32xf32>
    %111 = arith.negf %110 : vector<2x32xf32>
    %112 = math.exp %111 : vector<2x32xf32>
    %cst_28 = arith.constant 1.000000e+00 : f32
    %113 = vector.broadcast %cst_28 : f32 to vector<2x32xf32>
    %114 = arith.addf %113, %112 : vector<2x32xf32>
    %115 = arith.divf %113, %114 : vector<2x32xf32>
    %116 = vector.extract_strided_slice %103 {offsets = [0, 64], sizes = [2, 32], strides = [1, 1]} : vector<2x128xf32> to vector<2x32xf32>
    %117 = math.tanh %116 : vector<2x32xf32>
    %118 = vector.extract_strided_slice %103 {offsets = [0, 96], sizes = [2, 32], strides = [1, 1]} : vector<2x128xf32> to vector<2x32xf32>
    %119 = arith.negf %118 : vector<2x32xf32>
    %120 = math.exp %119 : vector<2x32xf32>
    %cst_29 = arith.constant 1.000000e+00 : f32
    %121 = vector.broadcast %cst_29 : f32 to vector<2x32xf32>
    %122 = arith.addf %121, %120 : vector<2x32xf32>
    %123 = arith.divf %121, %122 : vector<2x32xf32>
    %124 = arith.mulf %115, %94 : vector<2x32xf32>
    %125 = arith.mulf %109, %117 : vector<2x32xf32>
    %126 = arith.addf %124, %125 : vector<2x32xf32>
    %127 = math.tanh %126 : vector<2x32xf32>
    %128 = arith.mulf %123, %127 : vector<2x32xf32>
    %c0_30 = arith.constant 0 : index
    %c3 = arith.constant 3 : index
    %c0_31 = arith.constant 0 : index
    %129 = vector.load %arg5[%c0_30, %c3, %c0_31] : memref<2x8x32xf32, #tpu.memory_space<vmem>>, vector<2x1x32xf32>
    %130 = vector.shape_cast %129 : vector<2x1x32xf32> to vector<2x32xf32>
    %131 = vector.shape_cast %128 : vector<2x32xf32> to vector<2x1x32xf32>
    tpu.vector_store %arg5[%c0_30, %c3, %c0_31], %131 {strides = array<i32>} : memref<2x8x32xf32, #tpu.memory_space<vmem>>, vector<2x1x32xf32>,
    %132 = vector.extract_strided_slice %1 {offsets = [0, 4, 0], sizes = [2, 1, 128], strides = [1, 1, 1]} : vector<2x8x128xf32> to vector<2x1x128xf32>
    %133 = vector.shape_cast %132 : vector<2x1x128xf32> to vector<2x128xf32>
    %cst_32 = arith.constant dense<0.000000e+00> : vector<2x128xf32>
    %134 = tpu.matmul %128, %0, %cst_32 {dimension_numbers = #tpu.dot_dimension_numbers<[1], [0], [0], [1], [0, 0, 1, 1], [], []>} : vector<2x32xf32>, vector<32x128xf32>, vector<2x128xf32> -> vector<2x128xf32>
    %135 = arith.addf %133, %134 : vector<2x128xf32>
    %136 = vector.extract_strided_slice %135 {offsets = [0, 0], sizes = [2, 32], strides = [1, 1]} : vector<2x128xf32> to vector<2x32xf32>
    %137 = arith.negf %136 : vector<2x32xf32>
    %138 = math.exp %137 : vector<2x32xf32>
    %cst_33 = arith.constant 1.000000e+00 : f32
    %139 = vector.broadcast %cst_33 : f32 to vector<2x32xf32>
    %140 = arith.addf %139, %138 : vector<2x32xf32>
    %141 = arith.divf %139, %140 : vector<2x32xf32>
    %142 = vector.extract_strided_slice %135 {offsets = [0, 32], sizes = [2, 32], strides = [1, 1]} : vector<2x128xf32> to vector<2x32xf32>
    %143 = arith.negf %142 : vector<2x32xf32>
    %144 = math.exp %143 : vector<2x32xf32>
    %cst_34 = arith.constant 1.000000e+00 : f32
    %145 = vector.broadcast %cst_34 : f32 to vector<2x32xf32>
    %146 = arith.addf %145, %144 : vector<2x32xf32>
    %147 = arith.divf %145, %146 : vector<2x32xf32>
    %148 = vector.extract_strided_slice %135 {offsets = [0, 64], sizes = [2, 32], strides = [1, 1]} : vector<2x128xf32> to vector<2x32xf32>
    %149 = math.tanh %148 : vector<2x32xf32>
    %150 = vector.extract_strided_slice %135 {offsets = [0, 96], sizes = [2, 32], strides = [1, 1]} : vector<2x128xf32> to vector<2x32xf32>
    %151 = arith.negf %150 : vector<2x32xf32>
    %152 = math.exp %151 : vector<2x32xf32>
    %cst_35 = arith.constant 1.000000e+00 : f32
    %153 = vector.broadcast %cst_35 : f32 to vector<2x32xf32>
    %154 = arith.addf %153, %152 : vector<2x32xf32>
    %155 = arith.divf %153, %154 : vector<2x32xf32>
    %156 = arith.mulf %147, %126 : vector<2x32xf32>
    %157 = arith.mulf %141, %149 : vector<2x32xf32>
    %158 = arith.addf %156, %157 : vector<2x32xf32>
    %159 = math.tanh %158 : vector<2x32xf32>
    %160 = arith.mulf %155, %159 : vector<2x32xf32>
    %c0_36 = arith.constant 0 : index
    %c4 = arith.constant 4 : index
    %c0_37 = arith.constant 0 : index
    %161 = vector.load %arg5[%c0_36, %c4, %c0_37] : memref<2x8x32xf32, #tpu.memory_space<vmem>>, vector<2x1x32xf32>
    %162 = vector.shape_cast %161 : vector<2x1x32xf32> to vector<2x32xf32>
    %163 = vector.shape_cast %160 : vector<2x32xf32> to vector<2x1x32xf32>
    tpu.vector_store %arg5[%c0_36, %c4, %c0_37], %163 {strides = array<i32>} : memref<2x8x32xf32, #tpu.memory_space<vmem>>, vector<2x1x32xf32>,
    %164 = vector.extract_strided_slice %1 {offsets = [0, 5, 0], sizes = [2, 1, 128], strides = [1, 1, 1]} : vector<2x8x128xf32> to vector<2x1x128xf32>
    %165 = vector.shape_cast %164 : vector<2x1x128xf32> to vector<2x128xf32>
    %cst_38 = arith.constant dense<0.000000e+00> : vector<2x128xf32>
    %166 = tpu.matmul %160, %0, %cst_38 {dimension_numbers = #tpu.dot_dimension_numbers<[1], [0], [0], [1], [0, 0, 1, 1], [], []>} : vector<2x32xf32>, vector<32x128xf32>, vector<2x128xf32> -> vector<2x128xf32>
    %167 = arith.addf %165, %166 : vector<2x128xf32>
    %168 = vector.extract_strided_slice %167 {offsets = [0, 0], sizes = [2, 32], strides = [1, 1]} : vector<2x128xf32> to vector<2x32xf32>
    %169 = arith.negf %168 : vector<2x32xf32>
    %170 = math.exp %169 : vector<2x32xf32>
    %cst_39 = arith.constant 1.000000e+00 : f32
    %171 = vector.broadcast %cst_39 : f32 to vector<2x32xf32>
    %172 = arith.addf %171, %170 : vector<2x32xf32>
    %173 = arith.divf %171, %172 : vector<2x32xf32>
    %174 = vector.extract_strided_slice %167 {offsets = [0, 32], sizes = [2, 32], strides = [1, 1]} : vector<2x128xf32> to vector<2x32xf32>
    %175 = arith.negf %174 : vector<2x32xf32>
    %176 = math.exp %175 : vector<2x32xf32>
    %cst_40 = arith.constant 1.000000e+00 : f32
    %177 = vector.broadcast %cst_40 : f32 to vector<2x32xf32>
    %178 = arith.addf %177, %176 : vector<2x32xf32>
    %179 = arith.divf %177, %178 : vector<2x32xf32>
    %180 = vector.extract_strided_slice %167 {offsets = [0, 64], sizes = [2, 32], strides = [1, 1]} : vector<2x128xf32> to vector<2x32xf32>
    %181 = math.tanh %180 : vector<2x32xf32>
    %182 = vector.extract_strided_slice %167 {offsets = [0, 96], sizes = [2, 32], strides = [1, 1]} : vector<2x128xf32> to vector<2x32xf32>
    %183 = arith.negf %182 : vector<2x32xf32>
    %184 = math.exp %183 : vector<2x32xf32>
    %cst_41 = arith.constant 1.000000e+00 : f32
    %185 = vector.broadcast %cst_41 : f32 to vector<2x32xf32>
    %186 = arith.addf %185, %184 : vector<2x32xf32>
    %187 = arith.divf %185, %186 : vector<2x32xf32>
    %188 = arith.mulf %179, %158 : vector<2x32xf32>
    %189 = arith.mulf %173, %181 : vector<2x32xf32>
    %190 = arith.addf %188, %189 : vector<2x32xf32>
    %191 = math.tanh %190 : vector<2x32xf32>
    %192 = arith.mulf %187, %191 : vector<2x32xf32>
    %c0_42 = arith.constant 0 : index
    %c5 = arith.constant 5 : index
    %c0_43 = arith.constant 0 : index
    %193 = vector.load %arg5[%c0_42, %c5, %c0_43] : memref<2x8x32xf32, #tpu.memory_space<vmem>>, vector<2x1x32xf32>
    %194 = vector.shape_cast %193 : vector<2x1x32xf32> to vector<2x32xf32>
    %195 = vector.shape_cast %192 : vector<2x32xf32> to vector<2x1x32xf32>
    tpu.vector_store %arg5[%c0_42, %c5, %c0_43], %195 {strides = array<i32>} : memref<2x8x32xf32, #tpu.memory_space<vmem>>, vector<2x1x32xf32>,
    %196 = vector.extract_strided_slice %1 {offsets = [0, 6, 0], sizes = [2, 1, 128], strides = [1, 1, 1]} : vector<2x8x128xf32> to vector<2x1x128xf32>
    %197 = vector.shape_cast %196 : vector<2x1x128xf32> to vector<2x128xf32>
    %cst_44 = arith.constant dense<0.000000e+00> : vector<2x128xf32>
    %198 = tpu.matmul %192, %0, %cst_44 {dimension_numbers = #tpu.dot_dimension_numbers<[1], [0], [0], [1], [0, 0, 1, 1], [], []>} : vector<2x32xf32>, vector<32x128xf32>, vector<2x128xf32> -> vector<2x128xf32>
    %199 = arith.addf %197, %198 : vector<2x128xf32>
    %200 = vector.extract_strided_slice %199 {offsets = [0, 0], sizes = [2, 32], strides = [1, 1]} : vector<2x128xf32> to vector<2x32xf32>
    %201 = arith.negf %200 : vector<2x32xf32>
    %202 = math.exp %201 : vector<2x32xf32>
    %cst_45 = arith.constant 1.000000e+00 : f32
    %203 = vector.broadcast %cst_45 : f32 to vector<2x32xf32>
    %204 = arith.addf %203, %202 : vector<2x32xf32>
    %205 = arith.divf %203, %204 : vector<2x32xf32>
    %206 = vector.extract_strided_slice %199 {offsets = [0, 32], sizes = [2, 32], strides = [1, 1]} : vector<2x128xf32> to vector<2x32xf32>
    %207 = arith.negf %206 : vector<2x32xf32>
    %208 = math.exp %207 : vector<2x32xf32>
    %cst_46 = arith.constant 1.000000e+00 : f32
    %209 = vector.broadcast %cst_46 : f32 to vector<2x32xf32>
    %210 = arith.addf %209, %208 : vector<2x32xf32>
    %211 = arith.divf %209, %210 : vector<2x32xf32>
    %212 = vector.extract_strided_slice %199 {offsets = [0, 64], sizes = [2, 32], strides = [1, 1]} : vector<2x128xf32> to vector<2x32xf32>
    %213 = math.tanh %212 : vector<2x32xf32>
    %214 = vector.extract_strided_slice %199 {offsets = [0, 96], sizes = [2, 32], strides = [1, 1]} : vector<2x128xf32> to vector<2x32xf32>
    %215 = arith.negf %214 : vector<2x32xf32>
    %216 = math.exp %215 : vector<2x32xf32>
    %cst_47 = arith.constant 1.000000e+00 : f32
    %217 = vector.broadcast %cst_47 : f32 to vector<2x32xf32>
    %218 = arith.addf %217, %216 : vector<2x32xf32>
    %219 = arith.divf %217, %218 : vector<2x32xf32>
    %220 = arith.mulf %211, %190 : vector<2x32xf32>
    %221 = arith.mulf %205, %213 : vector<2x32xf32>
    %222 = arith.addf %220, %221 : vector<2x32xf32>
    %223 = math.tanh %222 : vector<2x32xf32>
    %224 = arith.mulf %219, %223 : vector<2x32xf32>
    %c0_48 = arith.constant 0 : index
    %c6 = arith.constant 6 : index
    %c0_49 = arith.constant 0 : index
    %225 = vector.load %arg5[%c0_48, %c6, %c0_49] : memref<2x8x32xf32, #tpu.memory_space<vmem>>, vector<2x1x32xf32>
    %226 = vector.shape_cast %225 : vector<2x1x32xf32> to vector<2x32xf32>
    %227 = vector.shape_cast %224 : vector<2x32xf32> to vector<2x1x32xf32>
    tpu.vector_store %arg5[%c0_48, %c6, %c0_49], %227 {strides = array<i32>} : memref<2x8x32xf32, #tpu.memory_space<vmem>>, vector<2x1x32xf32>,
    %228 = vector.extract_strided_slice %1 {offsets = [0, 7, 0], sizes = [2, 1, 128], strides = [1, 1, 1]} : vector<2x8x128xf32> to vector<2x1x128xf32>
    %229 = vector.shape_cast %228 : vector<2x1x128xf32> to vector<2x128xf32>
    %cst_50 = arith.constant dense<0.000000e+00> : vector<2x128xf32>
    %230 = tpu.matmul %224, %0, %cst_50 {dimension_numbers = #tpu.dot_dimension_numbers<[1], [0], [0], [1], [0, 0, 1, 1], [], []>} : vector<2x32xf32>, vector<32x128xf32>, vector<2x128xf32> -> vector<2x128xf32>
    %231 = arith.addf %229, %230 : vector<2x128xf32>
    %232 = vector.extract_strided_slice %231 {offsets = [0, 0], sizes = [2, 32], strides = [1, 1]} : vector<2x128xf32> to vector<2x32xf32>
    %233 = arith.negf %232 : vector<2x32xf32>
    %234 = math.exp %233 : vector<2x32xf32>
    %cst_51 = arith.constant 1.000000e+00 : f32
    %235 = vector.broadcast %cst_51 : f32 to vector<2x32xf32>
    %236 = arith.addf %235, %234 : vector<2x32xf32>
    %237 = arith.divf %235, %236 : vector<2x32xf32>
    %238 = vector.extract_strided_slice %231 {offsets = [0, 32], sizes = [2, 32], strides = [1, 1]} : vector<2x128xf32> to vector<2x32xf32>
    %239 = arith.negf %238 : vector<2x32xf32>
    %240 = math.exp %239 : vector<2x32xf32>
    %cst_52 = arith.constant 1.000000e+00 : f32
    %241 = vector.broadcast %cst_52 : f32 to vector<2x32xf32>
    %242 = arith.addf %241, %240 : vector<2x32xf32>
    %243 = arith.divf %241, %242 : vector<2x32xf32>
    %244 = vector.extract_strided_slice %231 {offsets = [0, 64], sizes = [2, 32], strides = [1, 1]} : vector<2x128xf32> to vector<2x32xf32>
    %245 = math.tanh %244 : vector<2x32xf32>
    %246 = vector.extract_strided_slice %231 {offsets = [0, 96], sizes = [2, 32], strides = [1, 1]} : vector<2x128xf32> to vector<2x32xf32>
    %247 = arith.negf %246 : vector<2x32xf32>
    %248 = math.exp %247 : vector<2x32xf32>
    %cst_53 = arith.constant 1.000000e+00 : f32
    %249 = vector.broadcast %cst_53 : f32 to vector<2x32xf32>
    %250 = arith.addf %249, %248 : vector<2x32xf32>
    %251 = arith.divf %249, %250 : vector<2x32xf32>
    %252 = arith.mulf %243, %222 : vector<2x32xf32>
    %253 = arith.mulf %237, %245 : vector<2x32xf32>
    %254 = arith.addf %252, %253 : vector<2x32xf32>
    %255 = math.tanh %254 : vector<2x32xf32>
    %256 = arith.mulf %251, %255 : vector<2x32xf32>
    %c0_54 = arith.constant 0 : index
    %c7 = arith.constant 7 : index
    %c0_55 = arith.constant 0 : index
    %257 = vector.load %arg5[%c0_54, %c7, %c0_55] : memref<2x8x32xf32, #tpu.memory_space<vmem>>, vector<2x1x32xf32>
    %258 = vector.shape_cast %257 : vector<2x1x32xf32> to vector<2x32xf32>
    %259 = vector.shape_cast %256 : vector<2x32xf32> to vector<2x1x32xf32>
    tpu.vector_store %arg5[%c0_54, %c7, %c0_55], %259 {strides = array<i32>} : memref<2x8x32xf32, #tpu.memory_space<vmem>>, vector<2x1x32xf32>,
    %c0_56 = arith.constant 0 : index
    %c0_57 = arith.constant 0 : index
    %260 = vector.load %arg6[%c0_56, %c0_57] : memref<2x32xf32, #tpu.memory_space<vmem>>, vector<2x32xf32>
    tpu.vector_store %arg6[%c0_56, %c0_57], %254 {strides = array<i32>} : memref<2x32xf32, #tpu.memory_space<vmem>>, vector<2x32xf32>,
    return
  }
  func.func @transform_0(%arg0: i32) -> (i32, i32, i32) {
    %c0_i32 = arith.constant 0 : i32
    %c0_i32_0 = arith.constant 0 : i32
    %c0_i32_1 = arith.constant 0 : i32
    %c0_i32_2 = arith.constant 0 : i32
    return %c0_i32, %c0_i32_0, %c0_i32_1 : i32, i32, i32
  }
  func.func @transform_1(%arg0: i32) -> (i32, i32) {
    %c0_i32 = arith.constant 0 : i32
    %c0_i32_0 = arith.constant 0 : i32
    %c0_i32_1 = arith.constant 0 : i32
    return %c0_i32, %c0_i32_0 : i32, i32
  }
  func.func @transform_2(%arg0: i32) -> (i32, i32) {
    %c0_i32 = arith.constant 0 : i32
    %c0_i32_0 = arith.constant 0 : i32
    %c0_i32_1 = arith.constant 0 : i32
    return %c0_i32, %c0_i32_0 : i32, i32
  }
  func.func @transform_3(%arg0: i32) -> (i32, i32) {
    %c0_i32 = arith.constant 0 : i32
    %c0_i32_0 = arith.constant 0 : i32
    %c0_i32_1 = arith.constant 0 : i32
    return %c0_i32, %c0_i32_0 : i32, i32
  }
  func.func @transform_4(%arg0: i32) -> (i32, i32, i32) {
    %c0_i32 = arith.constant 0 : i32
    %c0_i32_0 = arith.constant 0 : i32
    %c0_i32_1 = arith.constant 0 : i32
    %c0_i32_2 = arith.constant 0 : i32
    return %c0_i32, %c0_i32_0, %c0_i32_1 : i32, i32, i32
  }
  func.func @transform_5(%arg0: i32) -> (i32, i32) {
    %c0_i32 = arith.constant 0 : i32
    %c0_i32_0 = arith.constant 0 : i32
    %c0_i32_1 = arith.constant 0 : i32
    return %c0_i32, %c0_i32_0 : i32, i32
  }
}

</mosaic_0001>

<llo_original>
// kernel: lstm_forward.1
$region0: #{lstm_forward.1}
  #allocation0 [shape = 'u32[]', space=smem, size = 0x4, offset = 0x4, fixed_abs, tag = 'smem constant byte address 0x4 - core index']
  #allocation1 [shape = 'u32[72,128]{1,0:T(1,128)}', space=vmem, size = 0x9000, scoped, tag = 'internal scratch']
  %s0 = inlined_call_operand.vmem [shape: f32[2,8,128], index: 0, kind: input, shape index: {}]
  %s1 = inlined_call_operand.vmem [shape: f32[2,32], index: 1, kind: input, shape index: {}]
  %s2 = inlined_call_operand.vmem [shape: f32[2,32], index: 2, kind: input, shape index: {}]
  %s3 = inlined_call_operand.hbm [shape: f32[32,128], index: 3, kind: input, shape index: {}]
  %s4 = inlined_call_operand.vmem [shape: f32[2,8,32], index: 4, kind: output, shape index: {0}]
  %s5 = inlined_call_operand.hbm [shape: f32[2,32], index: 5, kind: output, shape index: {1}]
  %6 = xla_tuple %s4, %s5
  %s7 = sld [smem:[#allocation0]]
  $region38: #{lstm_forward.1} parent=0
    _
  %s9 = ssub.s32 1, %s7
  %s10 = scalar_select 0, %s9, %s7
  $region1: #{lstm_forward.1} parent=0
    #allocation2 [shape = 'u8[16384]{0}', space=vmem, size = 0x4000, scoped, tag = 'input window, operand 3, single buffered']
    #allocation3 [shape = 's32[1]{0}', space=sflag, size = 0x4, scoped, tag = 'scoped memory for lstm_forward.1']
    #allocation4 [shape = 's32[1]{0}', space=sflag, size = 0x4, scoped, tag = 'scoped memory for lstm_forward.1']
    #allocation5 [shape = 'u8[1024]{0}', space=vmem, size = 0x400, scoped, tag = 'output window, operand 1, single buffered']
    %11 = vsyncpa [#allocation3], 0
    %12 = vsyncpa [#allocation4], 0
    // Predicated region
    $region2: #{lstm_forward.1} parent=1 // pred_check
      _
    $region3: #{lstm_forward.1} parent=1 // pred_check_branch
      %14 = sbr.rel (0) target = $region5
    $region4: #{lstm_forward.1} parent=1 // pred_region
      _
    $region5: #{lstm_forward.1} parent=1 // pred_fallthru
      _
    // Predicated region
    $region6: #{lstm_forward.1} parent=1 // pred_check
      _
    $region7: #{lstm_forward.1} parent=1 // pred_check_branch
      %16 = sbr.rel (0) target = $region9
    $region8: #{lstm_forward.1} parent=1 // pred_region
      _
    $region9: #{lstm_forward.1} parent=1 // pred_fallthru
      _
    // Predicated region
    $region10: #{lstm_forward.1} parent=1 // pred_check
      _
    $region11: #{lstm_forward.1} parent=1 // pred_check_branch
      %18 = sbr.rel (0) target = $region13
    $region12: #{lstm_forward.1} parent=1 // pred_region
      _
    $region13: #{lstm_forward.1} parent=1 // pred_fallthru
      _
    // Predicated region
    $region14: #{lstm_forward.1} parent=1 // pred_check
      _
    $region15: #{lstm_forward.1} parent=1 // pred_check_branch
      %20 = sbr.rel (0) target = $region17
    $region16: #{lstm_forward.1} parent=1 // pred_region
      %22 = vsyncadd [#allocation3], 0
      %s23 = sshll.u32 %s3, 4
      %s24 = int_to_ptr.hbm [resolvable:$true] %s23
      %s25 = sshll.u32 [#allocation2], 4
      %s26 = int_to_ptr.vmem [resolvable:$true] %s25
      %31 = dma.hbm_to_vmem [thread:$0]  %s24, 512, %s26, [#allocation3], 128, 128, 8
    $region17: #{lstm_forward.1} parent=1 // pred_fallthru
      _
    // Predicated region
    $region18: #{lstm_forward.1} parent=1 // pred_check
      _
    $region19: #{lstm_forward.1} parent=1 // pred_check_branch
      %33 = sbr.rel (0) target = $region21
    $region20: #{lstm_forward.1} parent=1 // pred_region
      %35 = dma.done [#allocation3], 512
    $region21: #{lstm_forward.1} parent=1 // pred_fallthru
      _
    %v36 = vld [vmem:[#allocation2] sm:$0xff]
    %v37 = vld [vmem:[#allocation2 + $0x8] sm:$0xff]
    %v38 = vld [vmem:[#allocation2 + $0x10] sm:$0xff]
    %v39 = vld [vmem:[#allocation2 + $0x18] sm:$0xff]
    %v40 = vld [vmem:[%s0] sm:$0xff]
    %v41 = vld [vmem:[%s0 + $0x8] sm:$0xff]
    %v42 = vld [vmem:[%s1] sm:$0x3]
    %v43 = vld [vmem:[%s2] sm:$0x3]
    %vm44 = vcmask 261120
    %v46 = vsel %vm44, %v42, 0
    %48 = vmatpush.msra.mxu0 0.0
    %49 = vmatpush.msra.mxu0 0.0
    %50 = vmatpush.msra.mxu0 0.0
    %51 = vmatpush.msra.mxu0 0.0
    %52 = vmatpush.msra.mxu0 0.0
    %53 = vmatpush.msra.mxu0 0.0
    %54 = vmatpush.msra.mxu0 0.0
    %55 = vmatpush.msra.mxu0 0.0
    %56 = vmatpush.msra.mxu0 0.0
    %57 = vmatpush.msra.mxu0 0.0
    %58 = vmatpush.msra.mxu0 0.0
    %59 = vmatpush.msra.mxu0 0.0
    %60 = vmatpush.msra.mxu0 %v39
    %61 = vmatpush.msra.mxu0 %v38
    %62 = vmatpush.msra.mxu0 %v37
    %63 = vmatpush.msra.mxu0 %v36
    %64 = vmatmul.f32.gmra.mxu0 %v46
    %v65 = vpop.f32.mrf.mxu0
    %v66 = vadd.f32 0.0, %v65
    %67 = vdwg.mxu0
    %v69 = vrot.slane %v66, 1
    %v72 = vadd.f32 %v40, %v66
    %v73 = vadd.f32 %v41, %v69
    %v74 = vxor.u32 %v72, 2147483648
    %v75 = vxor.u32 %v73, 2147483648
    %v76 = vmul.f32 %v74, 1.442695
    %v77 = vpow.pop %v76
    %v78 = vmul.f32 %v75, 1.442695
    %v79 = vpow.pop %v78
    %v80 = vadd.f32 %v77, 1.0
    %v81 = vadd.f32 %v79, 1.0
    %v82 = vrcp.pop %v80
    %v83 = vmul.f32 %v80, %v82
    %v84 = vsub.f32 1.0, %v83
    %v85 = vmul.f32 %v82, %v84
    %v86 = vadd.f32 %v82, %v85
    %vm87 = vweird.f32 %v80
    %vm88 = vweird.f32 %v82
    %vm89 = vmor %vm87, %vm88
    %v90 = vsel %vm89, %v82, %v86
    %v91 = vand.u32 2147483647, %v80
    %vm92 = vcmp.eq.f32.partialorder %v91, 8.507059e+37
    %v93 = vand.u32 %v80, 2147483648
    %v94 = vor.u32 1.1754944e-38, %v93
    %v95 = vsel %vm92, %v94, %v90
    %v96 = vmul.f32 1.0, %v95
    %v97 = vrcp.pop %v81
    %v98 = vmul.f32 %v81, %v97
    %v99 = vsub.f32 1.0, %v98
    %v100 = vmul.f32 %v97, %v99
    %v101 = vadd.f32 %v97, %v100
    %vm102 = vweird.f32 %v81
    %vm103 = vweird.f32 %v97
    %vm104 = vmor %vm102, %vm103
    %v105 = vsel %vm104, %v97, %v101
    %v106 = vand.u32 2147483647, %v81
    %vm107 = vcmp.eq.f32.partialorder %v106, 8.507059e+37
    %v108 = vand.u32 %v81, 2147483648
    %v109 = vor.u32 1.1754944e-38, %v108
    %v110 = vsel %vm107, %v109, %v105
    %v111 = vmul.f32 1.0, %v110
    %v112 = vtanh.pop %v72
    %v113 = vtanh.pop %v73
    %v115 = vrot.slane %v43, 1
    %116 = vrot.lane.b32.xlu0 %v43, 32
    %v117 = vpop.permute.xlu0 %116
    %118 = vrot.lane.b32.xlu0 %v115, 32
    %v119 = vpop.permute.xlu0 %118
    %v122 = vmul.f32 %v96, %v117
    %v123 = vmul.f32 %v111, %v119
    %126 = vrot.lane.b32.xlu0 %v112, 64
    %v127 = vpop.permute.xlu0 %126
    %128 = vrot.lane.b32.xlu0 %v113, 64
    %v129 = vpop.permute.xlu0 %128
    %v132 = vmul.f32 %v96, %v127
    %v133 = vmul.f32 %v111, %v129
    %136 = vrot.lane.b32.xlu0 %v132, 32
    %v137 = vpop.permute.xlu0 %136
    %138 = vrot.lane.b32.xlu0 %v133, 32
    %v139 = vpop.permute.xlu0 %138
    %v142 = vadd.f32 %v122, %v137
    %v143 = vadd.f32 %v123, %v139
    %v144 = vtanh.pop %v142
    %v145 = vtanh.pop %v143
    %148 = vrot.lane.b32.xlu0 %v144, 64
    %v149 = vpop.permute.xlu0 %148
    %150 = vrot.lane.b32.xlu0 %v145, 64
    %v151 = vpop.permute.xlu0 %150
    %v154 = vmul.f32 %v96, %v149
    %v155 = vmul.f32 %v111, %v151
    %158 = vrot.lane.b32.xlu0 %v154, 32
    %v159 = vpop.permute.xlu0 %158
    %160 = vrot.lane.b32.xlu0 %v155, 32
    %v161 = vpop.permute.xlu0 %160
    %vm164 = vcmask 253952
    %165 = vst.msk [vmem:[%s4] sm:$0x1] %vm164, %v159
    %166 = vst.msk [vmem:[%s4 + $0x8] sm:$0x1] %vm164, %v161
    %v167 = vrot.slane %v155, 7
    %vm168 = vcmask 1041409
    %v169 = vsel %vm168, %v167, %v154
    %170 = vrot.lane.b32.xlu0 %v169, 32
    %v171 = vpop.permute.xlu0 %170
    %v172 = vsel %vm44, %v171, 0
    %174 = vmatpush.msra.mxu0 0.0
    %175 = vmatpush.msra.mxu0 0.0
    %176 = vmatpush.msra.mxu0 0.0
    %177 = vmatpush.msra.mxu0 0.0
    %178 = vmatpush.msra.mxu0 0.0
    %179 = vmatpush.msra.mxu0 0.0
    %180 = vmatpush.msra.mxu0 0.0
    %181 = vmatpush.msra.mxu0 0.0
    %182 = vmatpush.msra.mxu0 0.0
    %183 = vmatpush.msra.mxu0 0.0
    %184 = vmatpush.msra.mxu0 0.0
    %185 = vmatpush.msra.mxu0 0.0
    %186 = vmatpush.msra.mxu0 %v39
    %187 = vmatpush.msra.mxu0 %v38
    %188 = vmatpush.msra.mxu0 %v37
    %189 = vmatpush.msra.mxu0 %v36
    %190 = vmatmul.f32.gmra.mxu0 %v172
    %v191 = vpop.f32.mrf.mxu0
    %v192 = vadd.f32 0.0, %v191
    %193 = vdwg.mxu0
    %v195 = vrot.slane %v192, 7
    %v198 = vadd.f32 %v40, %v195
    %v199 = vadd.f32 %v41, %v192
    %v200 = vxor.u32 %v198, 2147483648
    %v201 = vxor.u32 %v199, 2147483648
    %v202 = vmul.f32 %v200, 1.442695
    %v203 = vpow.pop %v202
    %v204 = vmul.f32 %v201, 1.442695
    %v205 = vpow.pop %v204
    %v206 = vadd.f32 %v203, 1.0
    %v207 = vadd.f32 %v205, 1.0
    %v208 = vrcp.pop %v206
    %v209 = vmul.f32 %v206, %v208
    %v210 = vsub.f32 1.0, %v209
    %v211 = vmul.f32 %v208, %v210
    %v212 = vadd.f32 %v208, %v211
    %vm213 = vweird.f32 %v206
    %vm214 = vweird.f32 %v208
    %vm215 = vmor %vm213, %vm214
    %v216 = vsel %vm215, %v208, %v212
    %v217 = vand.u32 2147483647, %v206
    %vm218 = vcmp.eq.f32.partialorder %v217, 8.507059e+37
    %v219 = vand.u32 %v206, 2147483648
    %v220 = vor.u32 1.1754944e-38, %v219
    %v221 = vsel %vm218, %v220, %v216
    %v222 = vmul.f32 1.0, %v221
    %v223 = vrcp.pop %v207
    %v224 = vmul.f32 %v207, %v223
    %v225 = vsub.f32 1.0, %v224
    %v226 = vmul.f32 %v223, %v225
    %v227 = vadd.f32 %v223, %v226
    %vm228 = vweird.f32 %v207
    %vm229 = vweird.f32 %v223
    %vm230 = vmor %vm228, %vm229
    %v231 = vsel %vm230, %v223, %v227
    %v232 = vand.u32 2147483647, %v207
    %vm233 = vcmp.eq.f32.partialorder %v232, 8.507059e+37
    %v234 = vand.u32 %v207, 2147483648
    %v235 = vor.u32 1.1754944e-38, %v234
    %v236 = vsel %vm233, %v235, %v231
    %v237 = vmul.f32 1.0, %v236
    %v238 = vtanh.pop %v198
    %v239 = vtanh.pop %v199
    %v242 = vrot.slane %v142, 7
    %v243 = vrot.slane %v143, 7
    %v246 = vmul.f32 %v222, %v242
    %v247 = vmul.f32 %v237, %v243
    %250 = vrot.lane.b32.xlu0 %v238, 64
    %v251 = vpop.permute.xlu0 %250
    %252 = vrot.lane.b32.xlu0 %v239, 64
    %v253 = vpop.permute.xlu0 %252
    %v256 = vmul.f32 %v222, %v251
    %v257 = vmul.f32 %v237, %v253
    %260 = vrot.lane.b32.xlu0 %v256, 32
    %v261 = vpop.permute.xlu0 %260
    %262 = vrot.lane.b32.xlu0 %v257, 32
    %v263 = vpop.permute.xlu0 %262
    %v266 = vadd.f32 %v246, %v261
    %v267 = vadd.f32 %v247, %v263
    %v268 = vtanh.pop %v266
    %v269 = vtanh.pop %v267
    %272 = vrot.lane.b32.xlu0 %v268, 64
    %v273 = vpop.permute.xlu0 %272
    %274 = vrot.lane.b32.xlu0 %v269, 64
    %v275 = vpop.permute.xlu0 %274
    %v278 = vmul.f32 %v222, %v273
    %v279 = vmul.f32 %v237, %v275
    %282 = vrot.lane.b32.xlu0 %v278, 32
    %v283 = vpop.permute.xlu0 %282
    %284 = vrot.lane.b32.xlu0 %v279, 32
    %v285 = vpop.permute.xlu0 %284
    %vm288 = vcmask 254977
    %289 = vst.msk [vmem:[%s4] sm:$0x2] %vm288, %v283
    %290 = vst.msk [vmem:[%s4 + $0x8] sm:$0x2] %vm288, %v285
    %v291 = vrot.slane %v278, 1
    %v292 = vsel %vm168, %v279, %v291
    %293 = vrot.lane.b32.xlu0 %v292, 32
    %v294 = vpop.permute.xlu0 %293
    %v295 = vsel %vm44, %v294, 0
    %297 = vmatpush.msra.mxu0 0.0
    %298 = vmatpush.msra.mxu0 0.0
    %299 = vmatpush.msra.mxu0 0.0
    %300 = vmatpush.msra.mxu0 0.0
    %301 = vmatpush.msra.mxu0 0.0
    %302 = vmatpush.msra.mxu0 0.0
    %303 = vmatpush.msra.mxu0 0.0
    %304 = vmatpush.msra.mxu0 0.0
    %305 = vmatpush.msra.mxu0 0.0
    %306 = vmatpush.msra.mxu0 0.0
    %307 = vmatpush.msra.mxu0 0.0
    %308 = vmatpush.msra.mxu0 0.0
    %309 = vmatpush.msra.mxu0 %v39
    %310 = vmatpush.msra.mxu0 %v38
    %311 = vmatpush.msra.mxu0 %v37
    %312 = vmatpush.msra.mxu0 %v36
    %313 = vmatmul.f32.gmra.mxu0 %v295
    %v314 = vpop.f32.mrf.mxu0
    %v315 = vadd.f32 0.0, %v314
    %316 = vdwg.mxu0
    %v318 = vrot.slane %v315, 6
    %v319 = vrot.slane %v315, 7
    %v322 = vadd.f32 %v40, %v318
    %v323 = vadd.f32 %v41, %v319
    %v324 = vxor.u32 %v322, 2147483648
    %v325 = vxor.u32 %v323, 2147483648
    %v326 = vmul.f32 %v324, 1.442695
    %v327 = vpow.pop %v326
    %v328 = vmul.f32 %v325, 1.442695
    %v329 = vpow.pop %v328
    %v330 = vadd.f32 %v327, 1.0
    %v331 = vadd.f32 %v329, 1.0
    %v332 = vrcp.pop %v330
    %v333 = vmul.f32 %v330, %v332
    %v334 = vsub.f32 1.0, %v333
    %v335 = vmul.f32 %v332, %v334
    %v336 = vadd.f32 %v332, %v335
    %vm337 = vweird.f32 %v330
    %vm338 = vweird.f32 %v332
    %vm339 = vmor %vm337, %vm338
    %v340 = vsel %vm339, %v332, %v336
    %v341 = vand.u32 2147483647, %v330
    %vm342 = vcmp.eq.f32.partialorder %v341, 8.507059e+37
    %v343 = vand.u32 %v330, 2147483648
    %v344 = vor.u32 1.1754944e-38, %v343
    %v345 = vsel %vm342, %v344, %v340
    %v346 = vmul.f32 1.0, %v345
    %v347 = vrcp.pop %v331
    %v348 = vmul.f32 %v331, %v347
    %v349 = vsub.f32 1.0, %v348
    %v350 = vmul.f32 %v347, %v349
    %v351 = vadd.f32 %v347, %v350
    %vm352 = vweird.f32 %v331
    %vm353 = vweird.f32 %v347
    %vm354 = vmor %vm352, %vm353
    %v355 = vsel %vm354, %v347, %v351
    %v356 = vand.u32 2147483647, %v331
    %vm357 = vcmp.eq.f32.partialorder %v356, 8.507059e+37
    %v358 = vand.u32 %v331, 2147483648
    %v359 = vor.u32 1.1754944e-38, %v358
    %v360 = vsel %vm357, %v359, %v355
    %v361 = vmul.f32 1.0, %v360
    %v362 = vtanh.pop %v322
    %v363 = vtanh.pop %v323
    %v366 = vrot.slane %v266, 7
    %v367 = vrot.slane %v267, 7
    %v370 = vmul.f32 %v346, %v366
    %v371 = vmul.f32 %v361, %v367
    %374 = vrot.lane.b32.xlu0 %v362, 64
    %v375 = vpop.permute.xlu0 %374
    %376 = vrot.lane.b32.xlu0 %v363, 64
    %v377 = vpop.permute.xlu0 %376
    %v380 = vmul.f32 %v346, %v375
    %v381 = vmul.f32 %v361, %v377
    %384 = vrot.lane.b32.xlu0 %v380, 32
    %v385 = vpop.permute.xlu0 %384
    %386 = vrot.lane.b32.xlu0 %v381, 32
    %v387 = vpop.permute.xlu0 %386
    %v390 = vadd.f32 %v370, %v385
    %v391 = vadd.f32 %v371, %v387
    %v392 = vtanh.pop %v390
    %v393 = vtanh.pop %v391
    %396 = vrot.lane.b32.xlu0 %v392, 64
    %v397 = vpop.permute.xlu0 %396
    %398 = vrot.lane.b32.xlu0 %v393, 64
    %v399 = vpop.permute.xlu0 %398
    %v402 = vmul.f32 %v346, %v397
    %v403 = vmul.f32 %v361, %v399
    %406 = vrot.lane.b32.xlu0 %v402, 32
    %v407 = vpop.permute.xlu0 %406
    %408 = vrot.lane.b32.xlu0 %v403, 32
    %v409 = vpop.permute.xlu0 %408
    %vm412 = vcmask 256002
    %413 = vst.msk [vmem:[%s4] sm:$0x4] %vm412, %v407
    %414 = vst.msk [vmem:[%s4 + $0x8] sm:$0x4] %vm412, %v409
    %v415 = vrot.slane %v402, 2
    %v416 = vrot.slane %v403, 1
    %v417 = vsel %vm168, %v416, %v415
    %418 = vrot.lane.b32.xlu0 %v417, 32
    %v419 = vpop.permute.xlu0 %418
    %v420 = vsel %vm44, %v419, 0
    %422 = vmatpush.msra.mxu0 0.0
    %423 = vmatpush.msra.mxu0 0.0
    %424 = vmatpush.msra.mxu0 0.0
    %425 = vmatpush.msra.mxu0 0.0
    %426 = vmatpush.msra.mxu0 0.0
    %427 = vmatpush.msra.mxu0 0.0
    %428 = vmatpush.msra.mxu0 0.0
    %429 = vmatpush.msra.mxu0 0.0
    %430 = vmatpush.msra.mxu0 0.0
    %431 = vmatpush.msra.mxu0 0.0
    %432 = vmatpush.msra.mxu0 0.0
    %433 = vmatpush.msra.mxu0 0.0
    %434 = vmatpush.msra.mxu0 %v39
    %435 = vmatpush.msra.mxu0 %v38
    %436 = vmatpush.msra.mxu0 %v37
    %437 = vmatpush.msra.mxu0 %v36
    %438 = vmatmul.f32.gmra.mxu0 %v420
    %v439 = vpop.f32.mrf.mxu0
    %v440 = vadd.f32 0.0, %v439
    %441 = vdwg.mxu0
    %v443 = vrot.slane %v440, 5
    %v444 = vrot.slane %v440, 6
    %v447 = vadd.f32 %v40, %v443
    %v448 = vadd.f32 %v41, %v444
    %v449 = vxor.u32 %v447, 2147483648
    %v450 = vxor.u32 %v448, 2147483648
    %v451 = vmul.f32 %v449, 1.442695
    %v452 = vpow.pop %v451
    %v453 = vmul.f32 %v450, 1.442695
    %v454 = vpow.pop %v453
    %v455 = vadd.f32 %v452, 1.0
    %v456 = vadd.f32 %v454, 1.0
    %v457 = vrcp.pop %v455
    %v458 = vmul.f32 %v455, %v457
    %v459 = vsub.f32 1.0, %v458
    %v460 = vmul.f32 %v457, %v459
    %v461 = vadd.f32 %v457, %v460
    %vm462 = vweird.f32 %v455
    %vm463 = vweird.f32 %v457
    %vm464 = vmor %vm462, %vm463
    %v465 = vsel %vm464, %v457, %v461
    %v466 = vand.u32 2147483647, %v455
    %vm467 = vcmp.eq.f32.partialorder %v466, 8.507059e+37
    %v468 = vand.u32 %v455, 2147483648
    %v469 = vor.u32 1.1754944e-38, %v468
    %v470 = vsel %vm467, %v469, %v465
    %v471 = vmul.f32 1.0, %v470
    %v472 = vrcp.pop %v456
    %v473 = vmul.f32 %v456, %v472
    %v474 = vsub.f32 1.0, %v473
    %v475 = vmul.f32 %v472, %v474
    %v476 = vadd.f32 %v472, %v475
    %vm477 = vweird.f32 %v456
    %vm478 = vweird.f32 %v472
    %vm479 = vmor %vm477, %vm478
    %v480 = vsel %vm479, %v472, %v476
    %v481 = vand.u32 2147483647, %v456
    %vm482 = vcmp.eq.f32.partialorder %v481, 8.507059e+37
    %v483 = vand.u32 %v456, 2147483648
    %v484 = vor.u32 1.1754944e-38, %v483
    %v485 = vsel %vm482, %v484, %v480
    %v486 = vmul.f32 1.0, %v485
    %v487 = vtanh.pop %v447
    %v488 = vtanh.pop %v448
    %v491 = vrot.slane %v390, 7
    %v492 = vrot.slane %v391, 7
    %v495 = vmul.f32 %v471, %v491
    %v496 = vmul.f32 %v486, %v492
    %499 = vrot.lane.b32.xlu0 %v487, 64
    %v500 = vpop.permute.xlu0 %499
    %501 = vrot.lane.b32.xlu0 %v488, 64
    %v502 = vpop.permute.xlu0 %501
    %v505 = vmul.f32 %v471, %v500
    %v506 = vmul.f32 %v486, %v502
    %509 = vrot.lane.b32.xlu0 %v505, 32
    %v510 = vpop.permute.xlu0 %509
    %511 = vrot.lane.b32.xlu0 %v506, 32
    %v512 = vpop.permute.xlu0 %511
    %v515 = vadd.f32 %v495, %v510
    %v516 = vadd.f32 %v496, %v512
    %v517 = vtanh.pop %v515
    %v518 = vtanh.pop %v516
    %521 = vrot.lane.b32.xlu0 %v517, 64
    %v522 = vpop.permute.xlu0 %521
    %523 = vrot.lane.b32.xlu0 %v518, 64
    %v524 = vpop.permute.xlu0 %523
    %v527 = vmul.f32 %v471, %v522
    %v528 = vmul.f32 %v486, %v524
    %531 = vrot.lane.b32.xlu0 %v527, 32
    %v532 = vpop.permute.xlu0 %531
    %533 = vrot.lane.b32.xlu0 %v528, 32
    %v534 = vpop.permute.xlu0 %533
    %vm537 = vcmask 257027
    %538 = vst.msk [vmem:[%s4] sm:$0x8] %vm537, %v532
    %539 = vst.msk [vmem:[%s4 + $0x8] sm:$0x8] %vm537, %v534
    %v540 = vrot.slane %v527, 3
    %v541 = vrot.slane %v528, 2
    %v542 = vsel %vm168, %v541, %v540
    %543 = vrot.lane.b32.xlu0 %v542, 32
    %v544 = vpop.permute.xlu0 %543
    %v545 = vsel %vm44, %v544, 0
    %547 = vmatpush.msra.mxu0 0.0
    %548 = vmatpush.msra.mxu0 0.0
    %549 = vmatpush.msra.mxu0 0.0
    %550 = vmatpush.msra.mxu0 0.0
    %551 = vmatpush.msra.mxu0 0.0
    %552 = vmatpush.msra.mxu0 0.0
    %553 = vmatpush.msra.mxu0 0.0
    %554 = vmatpush.msra.mxu0 0.0
    %555 = vmatpush.msra.mxu0 0.0
    %556 = vmatpush.msra.mxu0 0.0
    %557 = vmatpush.msra.mxu0 0.0
    %558 = vmatpush.msra.mxu0 0.0
    %559 = vmatpush.msra.mxu0 %v39
    %560 = vmatpush.msra.mxu0 %v38
    %561 = vmatpush.msra.mxu0 %v37
    %562 = vmatpush.msra.mxu0 %v36
    %563 = vmatmul.f32.gmra.mxu0 %v545
    %v564 = vpop.f32.mrf.mxu0
    %v565 = vadd.f32 0.0, %v564
    %566 = vdwg.mxu0
    %v568 = vrot.slane %v565, 4
    %v569 = vrot.slane %v565, 5
    %v572 = vadd.f32 %v40, %v568
    %v573 = vadd.f32 %v41, %v569
    %v574 = vxor.u32 %v572, 2147483648
    %v575 = vxor.u32 %v573, 2147483648
    %v576 = vmul.f32 %v574, 1.442695
    %v577 = vpow.pop %v576
    %v578 = vmul.f32 %v575, 1.442695
    %v579 = vpow.pop %v578
    %v580 = vadd.f32 %v577, 1.0
    %v581 = vadd.f32 %v579, 1.0
    %v582 = vrcp.pop %v580
    %v583 = vmul.f32 %v580, %v582
    %v584 = vsub.f32 1.0, %v583
    %v585 = vmul.f32 %v582, %v584
    %v586 = vadd.f32 %v582, %v585
    %vm587 = vweird.f32 %v580
    %vm588 = vweird.f32 %v582
    %vm589 = vmor %vm587, %vm588
    %v590 = vsel %vm589, %v582, %v586
    %v591 = vand.u32 2147483647, %v580
    %vm592 = vcmp.eq.f32.partialorder %v591, 8.507059e+37
    %v593 = vand.u32 %v580, 2147483648
    %v594 = vor.u32 1.1754944e-38, %v593
    %v595 = vsel %vm592, %v594, %v590
    %v596 = vmul.f32 1.0, %v595
    %v597 = vrcp.pop %v581
    %v598 = vmul.f32 %v581, %v597
    %v599 = vsub.f32 1.0, %v598
    %v600 = vmul.f32 %v597, %v599
    %v601 = vadd.f32 %v597, %v600
    %vm602 = vweird.f32 %v581
    %vm603 = vweird.f32 %v597
    %vm604 = vmor %vm602, %vm603
    %v605 = vsel %vm604, %v597, %v601
    %v606 = vand.u32 2147483647, %v581
    %vm607 = vcmp.eq.f32.partialorder %v606, 8.507059e+37
    %v608 = vand.u32 %v581, 2147483648
    %v609 = vor.u32 1.1754944e-38, %v608
    %v610 = vsel %vm607, %v609, %v605
    %v611 = vmul.f32 1.0, %v610
    %v612 = vtanh.pop %v572
    %v613 = vtanh.pop %v573
    %v616 = vrot.slane %v515, 7
    %v617 = vrot.slane %v516, 7
    %v620 = vmul.f32 %v596, %v616
    %v621 = vmul.f32 %v611, %v617
    %624 = vrot.lane.b32.xlu0 %v612, 64
    %v625 = vpop.permute.xlu0 %624
    %626 = vrot.lane.b32.xlu0 %v613, 64
    %v627 = vpop.permute.xlu0 %626
    %v630 = vmul.f32 %v596, %v625
    %v631 = vmul.f32 %v611, %v627
    %634 = vrot.lane.b32.xlu0 %v630, 32
    %v635 = vpop.permute.xlu0 %634
    %636 = vrot.lane.b32.xlu0 %v631, 32
    %v637 = vpop.permute.xlu0 %636
    %v640 = vadd.f32 %v620, %v635
    %v641 = vadd.f32 %v621, %v637
    %v642 = vtanh.pop %v640
    %v643 = vtanh.pop %v641
    %646 = vrot.lane.b32.xlu0 %v642, 64
    %v647 = vpop.permute.xlu0 %646
    %648 = vrot.lane.b32.xlu0 %v643, 64
    %v649 = vpop.permute.xlu0 %648
    %v652 = vmul.f32 %v596, %v647
    %v653 = vmul.f32 %v611, %v649
    %656 = vrot.lane.b32.xlu0 %v652, 32
    %v657 = vpop.permute.xlu0 %656
    %658 = vrot.lane.b32.xlu0 %v653, 32
    %v659 = vpop.permute.xlu0 %658
    %vm662 = vcmask 258052
    %663 = vst.msk [vmem:[%s4] sm:$0x10] %vm662, %v657
    %664 = vst.msk [vmem:[%s4 + $0x8] sm:$0x10] %vm662, %v659
    %v665 = vrot.slane %v652, 4
    %v666 = vrot.slane %v653, 3
    %v667 = vsel %vm168, %v666, %v665
    %668 = vrot.lane.b32.xlu0 %v667, 32
    %v669 = vpop.permute.xlu0 %668
    %v670 = vsel %vm44, %v669, 0
    %672 = vmatpush.msra.mxu0 0.0
    %673 = vmatpush.msra.mxu0 0.0
    %674 = vmatpush.msra.mxu0 0.0
    %675 = vmatpush.msra.mxu0 0.0
    %676 = vmatpush.msra.mxu0 0.0
    %677 = vmatpush.msra.mxu0 0.0
    %678 = vmatpush.msra.mxu0 0.0
    %679 = vmatpush.msra.mxu0 0.0
    %680 = vmatpush.msra.mxu0 0.0
    %681 = vmatpush.msra.mxu0 0.0
    %682 = vmatpush.msra.mxu0 0.0
    %683 = vmatpush.msra.mxu0 0.0
    %684 = vmatpush.msra.mxu0 %v39
    %685 = vmatpush.msra.mxu0 %v38
    %686 = vmatpush.msra.mxu0 %v37
    %687 = vmatpush.msra.mxu0 %v36
    %688 = vmatmul.f32.gmra.mxu0 %v670
    %v689 = vpop.f32.mrf.mxu0
    %v690 = vadd.f32 0.0, %v689
    %691 = vdwg.mxu0
    %v693 = vrot.slane %v690, 3
    %v694 = vrot.slane %v690, 4
    %v697 = vadd.f32 %v40, %v693
    %v698 = vadd.f32 %v41, %v694
    %v699 = vxor.u32 %v697, 2147483648
    %v700 = vxor.u32 %v698, 2147483648
    %v701 = vmul.f32 %v699, 1.442695
    %v702 = vpow.pop %v701
    %v703 = vmul.f32 %v700, 1.442695
    %v704 = vpow.pop %v703
    %v705 = vadd.f32 %v702, 1.0
    %v706 = vadd.f32 %v704, 1.0
    %v707 = vrcp.pop %v705
    %v708 = vmul.f32 %v705, %v707
    %v709 = vsub.f32 1.0, %v708
    %v710 = vmul.f32 %v707, %v709
    %v711 = vadd.f32 %v707, %v710
    %vm712 = vweird.f32 %v705
    %vm713 = vweird.f32 %v707
    %vm714 = vmor %vm712, %vm713
    %v715 = vsel %vm714, %v707, %v711
    %v716 = vand.u32 2147483647, %v705
    %vm717 = vcmp.eq.f32.partialorder %v716, 8.507059e+37
    %v718 = vand.u32 %v705, 2147483648
    %v719 = vor.u32 1.1754944e-38, %v718
    %v720 = vsel %vm717, %v719, %v715
    %v721 = vmul.f32 1.0, %v720
    %v722 = vrcp.pop %v706
    %v723 = vmul.f32 %v706, %v722
    %v724 = vsub.f32 1.0, %v723
    %v725 = vmul.f32 %v722, %v724
    %v726 = vadd.f32 %v722, %v725
    %vm727 = vweird.f32 %v706
    %vm728 = vweird.f32 %v722
    %vm729 = vmor %vm727, %vm728
    %v730 = vsel %vm729, %v722, %v726
    %v731 = vand.u32 2147483647, %v706
    %vm732 = vcmp.eq.f32.partialorder %v731, 8.507059e+37
    %v733 = vand.u32 %v706, 2147483648
    %v734 = vor.u32 1.1754944e-38, %v733
    %v735 = vsel %vm732, %v734, %v730
    %v736 = vmul.f32 1.0, %v735
    %v737 = vtanh.pop %v697
    %v738 = vtanh.pop %v698
    %v741 = vrot.slane %v640, 7
    %v742 = vrot.slane %v641, 7
    %v745 = vmul.f32 %v721, %v741
    %v746 = vmul.f32 %v736, %v742
    %749 = vrot.lane.b32.xlu0 %v737, 64
    %v750 = vpop.permute.xlu0 %749
    %751 = vrot.lane.b32.xlu0 %v738, 64
    %v752 = vpop.permute.xlu0 %751
    %v755 = vmul.f32 %v721, %v750
    %v756 = vmul.f32 %v736, %v752
    %759 = vrot.lane.b32.xlu0 %v755, 32
    %v760 = vpop.permute.xlu0 %759
    %761 = vrot.lane.b32.xlu0 %v756, 32
    %v762 = vpop.permute.xlu0 %761
    %v765 = vadd.f32 %v745, %v760
    %v766 = vadd.f32 %v746, %v762
    %v767 = vtanh.pop %v765
    %v768 = vtanh.pop %v766
    %771 = vrot.lane.b32.xlu0 %v767, 64
    %v772 = vpop.permute.xlu0 %771
    %773 = vrot.lane.b32.xlu0 %v768, 64
    %v774 = vpop.permute.xlu0 %773
    %v777 = vmul.f32 %v721, %v772
    %v778 = vmul.f32 %v736, %v774
    %781 = vrot.lane.b32.xlu0 %v777, 32
    %v782 = vpop.permute.xlu0 %781
    %783 = vrot.lane.b32.xlu0 %v778, 32
    %v784 = vpop.permute.xlu0 %783
    %vm787 = vcmask 259077
    %788 = vst.msk [vmem:[%s4] sm:$0x20] %vm787, %v782
    %789 = vst.msk [vmem:[%s4 + $0x8] sm:$0x20] %vm787, %v784
    %v790 = vrot.slane %v777, 5
    %v791 = vrot.slane %v778, 4
    %v792 = vsel %vm168, %v791, %v790
    %793 = vrot.lane.b32.xlu0 %v792, 32
    %v794 = vpop.permute.xlu0 %793
    %v795 = vsel %vm44, %v794, 0
    %797 = vmatpush.msra.mxu0 0.0
    %798 = vmatpush.msra.mxu0 0.0
    %799 = vmatpush.msra.mxu0 0.0
    %800 = vmatpush.msra.mxu0 0.0
    %801 = vmatpush.msra.mxu0 0.0
    %802 = vmatpush.msra.mxu0 0.0
    %803 = vmatpush.msra.mxu0 0.0
    %804 = vmatpush.msra.mxu0 0.0
    %805 = vmatpush.msra.mxu0 0.0
    %806 = vmatpush.msra.mxu0 0.0
    %807 = vmatpush.msra.mxu0 0.0
    %808 = vmatpush.msra.mxu0 0.0
    %809 = vmatpush.msra.mxu0 %v39
    %810 = vmatpush.msra.mxu0 %v38
    %811 = vmatpush.msra.mxu0 %v37
    %812 = vmatpush.msra.mxu0 %v36
    %813 = vmatmul.f32.gmra.mxu0 %v795
    %v814 = vpop.f32.mrf.mxu0
    %v815 = vadd.f32 0.0, %v814
    %816 = vdwg.mxu0
    %v818 = vrot.slane %v815, 2
    %v819 = vrot.slane %v815, 3
    %v822 = vadd.f32 %v40, %v818
    %v823 = vadd.f32 %v41, %v819
    %v824 = vxor.u32 %v822, 2147483648
    %v825 = vxor.u32 %v823, 2147483648
    %v826 = vmul.f32 %v824, 1.442695
    %v827 = vpow.pop %v826
    %v828 = vmul.f32 %v825, 1.442695
    %v829 = vpow.pop %v828
    %v830 = vadd.f32 %v827, 1.0
    %v831 = vadd.f32 %v829, 1.0
    %v832 = vrcp.pop %v830
    %v833 = vmul.f32 %v830, %v832
    %v834 = vsub.f32 1.0, %v833
    %v835 = vmul.f32 %v832, %v834
    %v836 = vadd.f32 %v832, %v835
    %vm837 = vweird.f32 %v830
    %vm838 = vweird.f32 %v832
    %vm839 = vmor %vm837, %vm838
    %v840 = vsel %vm839, %v832, %v836
    %v841 = vand.u32 2147483647, %v830
    %vm842 = vcmp.eq.f32.partialorder %v841, 8.507059e+37
    %v843 = vand.u32 %v830, 2147483648
    %v844 = vor.u32 1.1754944e-38, %v843
    %v845 = vsel %vm842, %v844, %v840
    %v846 = vmul.f32 1.0, %v845
    %v847 = vrcp.pop %v831
    %v848 = vmul.f32 %v831, %v847
    %v849 = vsub.f32 1.0, %v848
    %v850 = vmul.f32 %v847, %v849
    %v851 = vadd.f32 %v847, %v850
    %vm852 = vweird.f32 %v831
    %vm853 = vweird.f32 %v847
    %vm854 = vmor %vm852, %vm853
    %v855 = vsel %vm854, %v847, %v851
    %v856 = vand.u32 2147483647, %v831
    %vm857 = vcmp.eq.f32.partialorder %v856, 8.507059e+37
    %v858 = vand.u32 %v831, 2147483648
    %v859 = vor.u32 1.1754944e-38, %v858
    %v860 = vsel %vm857, %v859, %v855
    %v861 = vmul.f32 1.0, %v860
    %v862 = vtanh.pop %v822
    %v863 = vtanh.pop %v823
    %v866 = vrot.slane %v765, 7
    %v867 = vrot.slane %v766, 7
    %v870 = vmul.f32 %v846, %v866
    %v871 = vmul.f32 %v861, %v867
    %874 = vrot.lane.b32.xlu0 %v862, 64
    %v875 = vpop.permute.xlu0 %874
    %876 = vrot.lane.b32.xlu0 %v863, 64
    %v877 = vpop.permute.xlu0 %876
    %v880 = vmul.f32 %v846, %v875
    %v881 = vmul.f32 %v861, %v877
    %884 = vrot.lane.b32.xlu0 %v880, 32
    %v885 = vpop.permute.xlu0 %884
    %886 = vrot.lane.b32.xlu0 %v881, 32
    %v887 = vpop.permute.xlu0 %886
    %v890 = vadd.f32 %v870, %v885
    %v891 = vadd.f32 %v871, %v887
    %v892 = vtanh.pop %v890
    %v893 = vtanh.pop %v891
    %896 = vrot.lane.b32.xlu0 %v892, 64
    %v897 = vpop.permute.xlu0 %896
    %898 = vrot.lane.b32.xlu0 %v893, 64
    %v899 = vpop.permute.xlu0 %898
    %v902 = vmul.f32 %v846, %v897
    %v903 = vmul.f32 %v861, %v899
    %906 = vrot.lane.b32.xlu0 %v902, 32
    %v907 = vpop.permute.xlu0 %906
    %908 = vrot.lane.b32.xlu0 %v903, 32
    %v909 = vpop.permute.xlu0 %908
    %vm912 = vcmask 260102
    %913 = vst.msk [vmem:[%s4] sm:$0x40] %vm912, %v907
    %914 = vst.msk [vmem:[%s4 + $0x8] sm:$0x40] %vm912, %v909
    %v915 = vrot.slane %v902, 6
    %v916 = vrot.slane %v903, 5
    %v917 = vsel %vm168, %v916, %v915
    %918 = vrot.lane.b32.xlu0 %v917, 32
    %v919 = vpop.permute.xlu0 %918
    %v920 = vsel %vm44, %v919, 0
    %922 = vmatpush.msra.mxu0 0.0
    %923 = vmatpush.msra.mxu0 0.0
    %924 = vmatpush.msra.mxu0 0.0
    %925 = vmatpush.msra.mxu0 0.0
    %926 = vmatpush.msra.mxu0 0.0
    %927 = vmatpush.msra.mxu0 0.0
    %928 = vmatpush.msra.mxu0 0.0
    %929 = vmatpush.msra.mxu0 0.0
    %930 = vmatpush.msra.mxu0 0.0
    %931 = vmatpush.msra.mxu0 0.0
    %932 = vmatpush.msra.mxu0 0.0
    %933 = vmatpush.msra.mxu0 0.0
    %934 = vmatpush.msra.mxu0 %v39
    %935 = vmatpush.msra.mxu0 %v38
    %936 = vmatpush.msra.mxu0 %v37
    %937 = vmatpush.msra.mxu0 %v36
    %938 = vmatmul.f32.gmra.mxu0 %v920
    %v939 = vpop.f32.mrf.mxu0
    %v940 = vadd.f32 0.0, %v939
    %941 = vdwg.mxu0
    %v943 = vrot.slane %v940, 1
    %v944 = vrot.slane %v940, 2
    %v947 = vadd.f32 %v40, %v943
    %v948 = vadd.f32 %v41, %v944
    %v949 = vxor.u32 %v947, 2147483648
    %v950 = vxor.u32 %v948, 2147483648
    %v951 = vmul.f32 %v949, 1.442695
    %v952 = vpow.pop %v951
    %v953 = vmul.f32 %v950, 1.442695
    %v954 = vpow.pop %v953
    %v955 = vadd.f32 %v952, 1.0
    %v956 = vadd.f32 %v954, 1.0
    %v957 = vrcp.pop %v955
    %v958 = vmul.f32 %v955, %v957
    %v959 = vsub.f32 1.0, %v958
    %v960 = vmul.f32 %v957, %v959
    %v961 = vadd.f32 %v957, %v960
    %vm962 = vweird.f32 %v955
    %vm963 = vweird.f32 %v957
    %vm964 = vmor %vm962, %vm963
    %v965 = vsel %vm964, %v957, %v961
    %v966 = vand.u32 2147483647, %v955
    %vm967 = vcmp.eq.f32.partialorder %v966, 8.507059e+37
    %v968 = vand.u32 %v955, 2147483648
    %v969 = vor.u32 1.1754944e-38, %v968
    %v970 = vsel %vm967, %v969, %v965
    %v971 = vmul.f32 1.0, %v970
    %v972 = vrcp.pop %v956
    %v973 = vmul.f32 %v956, %v972
    %v974 = vsub.f32 1.0, %v973
    %v975 = vmul.f32 %v972, %v974
    %v976 = vadd.f32 %v972, %v975
    %vm977 = vweird.f32 %v956
    %vm978 = vweird.f32 %v972
    %vm979 = vmor %vm977, %vm978
    %v980 = vsel %vm979, %v972, %v976
    %v981 = vand.u32 2147483647, %v956
    %vm982 = vcmp.eq.f32.partialorder %v981, 8.507059e+37
    %v983 = vand.u32 %v956, 2147483648
    %v984 = vor.u32 1.1754944e-38, %v983
    %v985 = vsel %vm982, %v984, %v980
    %v986 = vmul.f32 1.0, %v985
    %v987 = vtanh.pop %v947
    %v988 = vtanh.pop %v948
    %v991 = vrot.slane %v890, 7
    %v992 = vrot.slane %v891, 7
    %v995 = vmul.f32 %v971, %v991
    %v996 = vmul.f32 %v986, %v992
    %999 = vrot.lane.b32.xlu0 %v987, 64
    %v1000 = vpop.permute.xlu0 %999
    %1001 = vrot.lane.b32.xlu0 %v988, 64
    %v1002 = vpop.permute.xlu0 %1001
    %v1005 = vmul.f32 %v971, %v1000
    %v1006 = vmul.f32 %v986, %v1002
    %1009 = vrot.lane.b32.xlu0 %v1005, 32
    %v1010 = vpop.permute.xlu0 %1009
    %1011 = vrot.lane.b32.xlu0 %v1006, 32
    %v1012 = vpop.permute.xlu0 %1011
    %v1015 = vadd.f32 %v995, %v1010
    %v1016 = vadd.f32 %v996, %v1012
    %v1017 = vtanh.pop %v1015
    %v1018 = vtanh.pop %v1016
    %1021 = vrot.lane.b32.xlu0 %v1017, 64
    %v1022 = vpop.permute.xlu0 %1021
    %1023 = vrot.lane.b32.xlu0 %v1018, 64
    %v1024 = vpop.permute.xlu0 %1023
    %v1027 = vmul.f32 %v971, %v1022
    %v1028 = vmul.f32 %v986, %v1024
    %1031 = vrot.lane.b32.xlu0 %v1027, 32
    %v1032 = vpop.permute.xlu0 %1031
    %1033 = vrot.lane.b32.xlu0 %v1028, 32
    %v1034 = vpop.permute.xlu0 %1033
    %vm1037 = vcmask 261127
    %1038 = vst.msk [vmem:[%s4] sm:$0x80] %vm1037, %v1032
    %1039 = vst.msk [vmem:[%s4 + $0x8] sm:$0x80] %vm1037, %v1034
    %v1042 = vrot.slane %v1016, 7
    %1043 = vrot.lane.b32.xlu0 %v1015, 96
    %v1044 = vpop.permute.xlu0 %1043
    %1045 = vrot.lane.b32.xlu0 %v1042, 96
    %v1046 = vpop.permute.xlu0 %1045
    %1049 = vst.msk [vmem:[#allocation5 - $0x7] sm:$0x80] %vm1037, %v1044
    %1050 = vst.msk [vmem:[#allocation5 + $0x1] sm:$0x1] %vm164, %v1046
    // Predicated region
    $region22: #{lstm_forward.1} parent=1 // pred_check
      _
    $region23: #{lstm_forward.1} parent=1 // pred_check_branch
      %1052 = sbr.rel (0) target = $region25
    $region24: #{lstm_forward.1} parent=1 // pred_region
      _
    $region25: #{lstm_forward.1} parent=1 // pred_fallthru
      _
    // Predicated region
    $region26: #{lstm_forward.1} parent=1 // pred_check
      _
    $region27: #{lstm_forward.1} parent=1 // pred_check_branch
      %1054 = sbr.rel (0) target = $region29
    $region28: #{lstm_forward.1} parent=1 // pred_region
      %1056 = vsyncadd [#allocation4], 0
      %s1058 = sshll.u32 [#allocation5], 4
      %s1059 = int_to_ptr.vmem [resolvable:$true] %s1058
      %s1060 = sshll.u32 %s5, 4
      %s1061 = int_to_ptr.hbm [resolvable:$true] %s1060
      %1063 = dma.vmem_to_hbm [thread:$0]  %s1059, 32, %s1061, [#allocation4]
    $region29: #{lstm_forward.1} parent=1 // pred_fallthru
      _
    // Predicated region
    $region30: #{lstm_forward.1} parent=1 // pred_check
      _
    $region31: #{lstm_forward.1} parent=1 // pred_check_branch
      %1065 = sbr.rel (0) target = $region33
    $region32: #{lstm_forward.1} parent=1 // pred_region
      _
    $region33: #{lstm_forward.1} parent=1 // pred_fallthru
      _
    // Predicated region
    $region34: #{lstm_forward.1} parent=1 // pred_check
      _
    $region35: #{lstm_forward.1} parent=1 // pred_check_branch
      %1067 = sbr.rel (0) target = $region37
    $region36: #{lstm_forward.1} parent=1 // pred_region
      %1069 = dma.done [#allocation4], 32
    $region37: #{lstm_forward.1} parent=1 // pred_fallthru
      _
    %1070 = vsyncpa [#allocation3], 1
    %1071 = vsyncpa [#allocation4], 1

</llo_original>
